<compile_context>
chip_gen: v7x
topology: tpu7x:2x2x1
jax: 0.10.0
libtpu: 0.0.40
codegen_flags: <defaults>
</compile_context>

<pallas_src>
import jax
import jax.numpy as jnp
from jax.experimental import pallas as pl
from jax.experimental.pallas import tpu as pltpu


def _round_up(n, m):
    return ((n + m - 1) // m) * m


def decoder_kernel(x_ref, w1_ref, b1_ref, w2_ref, b2_ref, out_ref):
    # fc1 + ReLU  (MXU matmul, bf16 inputs, f32 accumulate)
    h = jnp.dot(x_ref[...], w1_ref[...], preferred_element_type=jnp.float32)
    h = jnp.maximum(h + b1_ref[...], 0.0)            # (TB, Hp) + (1, Hp) broadcast
    # fc2 + sigmoid (cast ReLU output to bf16 exactly once for the MXU)
    y = jnp.dot(h.astype(jnp.bfloat16), w2_ref[...],
                preferred_element_type=jnp.float32)
    y = y + b2_ref[...]                               # (TB, Dp) + (1, Dp) broadcast
    out_ref[...] = jax.nn.sigmoid(y).astype(out_ref.dtype)


def decoder_forward(x, w1, b1, w2, b2, *, block_b=256, out_dtype=jnp.float32):
    """x: (B, latent); w1: (latent, hidden); b1: (1, hidden);
       w2: (hidden, input); b2: (1, input)  ->  (B, input)

    Wrapper zero-pads feature dims to multiples of 128 (lane-dense) and tiles
    the batch; padded rows/cols are sliced off before returning.
    """
    B, L = x.shape
    H = w1.shape[1]
    D = w2.shape[1]

    Lp = _round_up(L, 128)
    Hp = _round_up(H, 128)
    Dp = _round_up(D, 128)

    # Batch tile: as large as block_b allows, always a multiple of 8 sublanes.
    TB = min(block_b, _round_up(B, 8))
    Bp = _round_up(B, TB)

    # Zero-pad + cast MXU operands to bf16 (halves DMA/VMEM bytes, full-rate MXU).
    xp  = jnp.zeros((Bp, Lp), jnp.bfloat16).at[:B, :L].set(x.astype(jnp.bfloat16))
    w1p = jnp.zeros((Lp, Hp), jnp.bfloat16).at[:L, :H].set(w1.astype(jnp.bfloat16))
    b1p = jnp.zeros((1, Hp), jnp.float32).at[:, :H].set(b1.astype(jnp.float32))
    w2p = jnp.zeros((Hp, Dp), jnp.bfloat16).at[:H, :D].set(w2.astype(jnp.bfloat16))
    b2p = jnp.zeros((1, Dp), jnp.float32).at[:, :D].set(b2.astype(jnp.float32))

    grid = (Bp // TB,)

    out_padded = pl.pallas_call(
        decoder_kernel,
        out_shape=jax.ShapeDtypeStruct((Bp, Dp), out_dtype),
        grid_spec=pltpu.PrefetchScalarGridSpec(
            num_scalar_prefetch=0,
            grid=grid,
            in_specs=[
                # x: batch-tiled, double-buffered by the auto-pipeline.
                pl.BlockSpec((TB, Lp), lambda i: (i, 0)),
                # Weights / biases: constant index_map -> resident in VMEM.
                pl.BlockSpec((Lp, Hp), lambda i: (0, 0)),
                pl.BlockSpec((1, Hp),  lambda i: (0, 0)),
                pl.BlockSpec((Hp, Dp), lambda i: (0, 0)),
                pl.BlockSpec((1, Dp),  lambda i: (0, 0)),
            ],
            out_specs=pl.BlockSpec((TB, Dp), lambda i: (i, 0)),
        ),
        compiler_params=pltpu.CompilerParams(
            # Batch blocks are independent -> shard across TCs on v7x.
            dimension_semantics=("parallel",),
            # Budget within v7x's 64 MiB physical VMEM; fine for v5e/v6e too.
            vmem_limit_bytes=64 * 1024 * 1024,
        ),
    )(xp, w1p, b1p, w2p, b2p)

    return out_padded[:B, :D]


def init_params(key, input_dim, hidden_dim, latent_dim):
    """Deterministic synthetic init matching nn.Linear shapes.
       PyTorch stores W as (out, in); we keep (in, out) for the kernel."""
    k1, k2, k3, k4 = jax.random.split(key, 4)
    w1 = jax.random.normal(k1, (latent_dim, hidden_dim), jnp.float32) * 0.1
    b1 = jax.random.normal(k2, (1, hidden_dim), jnp.float32) * 0.1
    w2 = jax.random.normal(k3, (hidden_dim, input_dim), jnp.float32) * 0.1
    b2 = jax.random.normal(k4, (1, input_dim), jnp.float32) * 0.1
    return w1, b1, w2, b2


def decoder_ref_f32(x, w1, b1, w2, b2):
    h = jnp.maximum(x @ w1 + b1, 0.0)
    return jax.nn.sigmoid(h @ w2 + b2)


def decoder_ref_bf16(x, w1, b1, w2, b2):
    """Reference mirroring the kernel's bf16-input / f32-accumulate numerics."""
    f32 = jnp.float32
    xb = x.astype(jnp.bfloat16).astype(f32)
    w1b = w1.astype(jnp.bfloat16).astype(f32)
    w2b = w2.astype(jnp.bfloat16).astype(f32)
    h = jnp.maximum(xb @ w1b + b1, 0.0)
    hb = h.astype(jnp.bfloat16).astype(f32)
    return jax.nn.sigmoid(hb @ w2b + b2)


if __name__ == "__main__":
    # Small shapes implied by the module: latent=8, hidden=32, input=64, batch=8.
    batch, latent_dim, hidden_dim, input_dim = 8, 8, 32, 64

    key = jax.random.PRNGKey(0)
    kx, kp = jax.random.split(key)
    x = jax.random.normal(kx, (batch, latent_dim), jnp.float32)
    w1, b1, w2, b2 = init_params(kp, input_dim, hidden_dim, latent_dim)

    out = decoder_forward(x, w1, b1, w2, b2)
    out = jax.block_until_ready(out)
    assert out.shape == (batch, input_dim)

    # Tight check vs a reference following the same bf16-input numerics.
    ref_bf16 = decoder_ref_bf16(x, w1, b1, w2, b2)
    assert jnp.allclose(out, ref_bf16, atol=2e-3, rtol=2e-3), \
        "mismatch vs bf16-path reference"

    # Semantic sanity vs the pure-f32 PyTorch-equivalent math (bf16 cast noise).
    ref_f32 = decoder_ref_f32(x, w1, b1, w2, b2)
    assert jnp.allclose(out, ref_f32, atol=3e-2, rtol=3e-2), \
        "mismatch vs f32 reference"

    print("KERNEL_OK")
</pallas_src>

<mosaic_0001>
module attributes {stable_mosaic.version = 11 : i64} {
  func.func @decoder_kernel(%arg0: i32, %arg1: memref<8x128xbf16, #tpu.memory_space<vmem>>, %arg2: memref<128x128xbf16, #tpu.memory_space<vmem>>, %arg3: memref<1x128xf32, #tpu.memory_space<vmem>>, %arg4: memref<128x128xbf16, #tpu.memory_space<vmem>>, %arg5: memref<1x128xf32, #tpu.memory_space<vmem>>, %arg6: memref<8x128xf32, #tpu.memory_space<vmem>>) attributes {dimension_semantics = [#tpu.dimension_semantics<parallel>], iteration_bounds = array<i64: 1>, scalar_prefetch = 0 : i64, scratch_operands = 0 : i64, tpu.core_type = #tpu.core_type<tc>, window_params = [{transform_indices = @transform_0, window_bounds = array<i64: 8, 128>}, {pipeline_mode = #tpu.pipeline_mode<synchronous>, transform_indices = @transform_1, window_bounds = array<i64: 128, 128>}, {pipeline_mode = #tpu.pipeline_mode<synchronous>, transform_indices = @transform_2, window_bounds = array<i64: 1, 128>}, {pipeline_mode = #tpu.pipeline_mode<synchronous>, transform_indices = @transform_3, window_bounds = array<i64: 128, 128>}, {pipeline_mode = #tpu.pipeline_mode<synchronous>, transform_indices = @transform_4, window_bounds = array<i64: 1, 128>}, {transform_indices = @transform_5, window_bounds = array<i64: 8, 128>}]} {
    %c0 = arith.constant 0 : index
    %c0_0 = arith.constant 0 : index
    %0 = vector.load %arg1[%c0, %c0_0] : memref<8x128xbf16, #tpu.memory_space<vmem>>, vector<8x128xbf16>
    %c0_1 = arith.constant 0 : index
    %c0_2 = arith.constant 0 : index
    %1 = vector.load %arg2[%c0_1, %c0_2] : memref<128x128xbf16, #tpu.memory_space<vmem>>, vector<128x128xbf16>
    %cst = arith.constant dense<0.000000e+00> : vector<8x128xf32>
    %2 = tpu.matmul %0, %1, %cst {dimension_numbers = #tpu.dot_dimension_numbers<[1], [0], [0], [1], [0, 0, 1, 1], [], []>} : vector<8x128xbf16>, vector<128x128xbf16>, vector<8x128xf32> -> vector<8x128xf32>
    %c0_3 = arith.constant 0 : index
    %c0_4 = arith.constant 0 : index
    %3 = vector.load %arg3[%c0_3, %c0_4] : memref<1x128xf32, #tpu.memory_space<vmem>>, vector<1x128xf32>
    %4 = vector.broadcast %3 : vector<1x128xf32> to vector<8x128xf32>
    %5 = arith.addf %2, %4 : vector<8x128xf32>
    %cst_5 = arith.constant 0.000000e+00 : f32
    %6 = vector.broadcast %cst_5 : f32 to vector<8x128xf32>
    %7 = arith.maximumf %5, %6 : vector<8x128xf32>
    %8 = arith.truncf %7 : vector<8x128xf32> to vector<8x128xbf16>
    %c0_6 = arith.constant 0 : index
    %c0_7 = arith.constant 0 : index
    %9 = vector.load %arg4[%c0_6, %c0_7] : memref<128x128xbf16, #tpu.memory_space<vmem>>, vector<128x128xbf16>
    %cst_8 = arith.constant dense<0.000000e+00> : vector<8x128xf32>
    %10 = tpu.matmul %8, %9, %cst_8 {dimension_numbers = #tpu.dot_dimension_numbers<[1], [0], [0], [1], [0, 0, 1, 1], [], []>} : vector<8x128xbf16>, vector<128x128xbf16>, vector<8x128xf32> -> vector<8x128xf32>
    %c0_9 = arith.constant 0 : index
    %c0_10 = arith.constant 0 : index
    %11 = vector.load %arg5[%c0_9, %c0_10] : memref<1x128xf32, #tpu.memory_space<vmem>>, vector<1x128xf32>
    %12 = vector.broadcast %11 : vector<1x128xf32> to vector<8x128xf32>
    %13 = arith.addf %10, %12 : vector<8x128xf32>
    %14 = arith.negf %13 : vector<8x128xf32>
    %15 = math.exp %14 : vector<8x128xf32>
    %cst_11 = arith.constant 1.000000e+00 : f32
    %16 = vector.broadcast %cst_11 : f32 to vector<8x128xf32>
    %17 = arith.addf %16, %15 : vector<8x128xf32>
    %18 = arith.divf %16, %17 : vector<8x128xf32>
    %c0_12 = arith.constant 0 : index
    %c0_13 = arith.constant 0 : index
    %19 = vector.load %arg6[%c0_12, %c0_13] : memref<8x128xf32, #tpu.memory_space<vmem>>, vector<8x128xf32>
    tpu.vector_store %arg6[%c0_12, %c0_13], %18 {strides = array<i32>} : memref<8x128xf32, #tpu.memory_space<vmem>>, vector<8x128xf32>,
    return
  }
  func.func @transform_0(%arg0: i32) -> (i32, i32) {
    %c0_i32 = arith.constant 0 : i32
    %c0_i32_0 = arith.constant 0 : i32
    return %arg0, %c0_i32 : i32, i32
  }
  func.func @transform_1(%arg0: i32) -> (i32, i32) {
    %c0_i32 = arith.constant 0 : i32
    %c0_i32_0 = arith.constant 0 : i32
    %c0_i32_1 = arith.constant 0 : i32
    return %c0_i32, %c0_i32_0 : i32, i32
  }
  func.func @transform_2(%arg0: i32) -> (i32, i32) {
    %c0_i32 = arith.constant 0 : i32
    %c0_i32_0 = arith.constant 0 : i32
    %c0_i32_1 = arith.constant 0 : i32
    return %c0_i32, %c0_i32_0 : i32, i32
  }
  func.func @transform_3(%arg0: i32) -> (i32, i32) {
    %c0_i32 = arith.constant 0 : i32
    %c0_i32_0 = arith.constant 0 : i32
    %c0_i32_1 = arith.constant 0 : i32
    return %c0_i32, %c0_i32_0 : i32, i32
  }
  func.func @transform_4(%arg0: i32) -> (i32, i32) {
    %c0_i32 = arith.constant 0 : i32
    %c0_i32_0 = arith.constant 0 : i32
    %c0_i32_1 = arith.constant 0 : i32
    return %c0_i32, %c0_i32_0 : i32, i32
  }
  func.func @transform_5(%arg0: i32) -> (i32, i32) {
    %c0_i32 = arith.constant 0 : i32
    %c0_i32_0 = arith.constant 0 : i32
    return %arg0, %c0_i32 : i32, i32
  }
}

</mosaic_0001>

<llo_original>
// kernel: tpu_custom_call.1
$region0: #{tpu_custom_call.1}
  #allocation0 [shape = 'u32[]', space=smem, size = 0x4, offset = 0x4, fixed_abs, tag = 'smem constant byte address 0x4 - core index']
  #allocation1 [shape = 'u32[144,128]{1,0:T(1,128)}', space=vmem, size = 0x12000, scoped, tag = 'internal scratch']
  %s0 = inlined_call_operand.hbm [shape: bf16[8,128], index: 0, kind: input, shape index: {}]
  %s1 = inlined_call_operand.hbm [shape: bf16[128,128], index: 1, kind: input, shape index: {}]
  %s2 = inlined_call_operand.hbm [shape: f32[1,128], index: 2, kind: input, shape index: {}]
  %s3 = inlined_call_operand.hbm [shape: bf16[128,128], index: 3, kind: input, shape index: {}]
  %s4 = inlined_call_operand.hbm [shape: f32[1,128], index: 4, kind: input, shape index: {}]
  %s5 = inlined_call_operand.hbm [shape: f32[8,128], index: 5, kind: output, shape index: {}]
  %s6 = sld [smem:[#allocation0]]
  $region50: #{tpu_custom_call.1} parent=0
    _
  %s8 = ssub.s32 1, %s6
  %s9 = scalar_select 0, %s8, %s6
  $region1: #{tpu_custom_call.1} parent=0
    #allocation2 [shape = 'u8[2048]{0}', space=vmem, size = 0x800, scoped, tag = 'input window, operand 0, single buffered']
    #allocation3 [shape = 's32[1]{0}', space=sflag, size = 0x4, scoped, tag = 'scoped memory for tpu_custom_call.1']
    #allocation4 [shape = 's32[1]{0}', space=sflag, size = 0x4, scoped, tag = 'scoped memory for tpu_custom_call.1']
    #allocation5 [shape = 'u8[32768]{0}', space=vmem, size = 0x8000, scoped, tag = 'input window, operand 1, single buffered']
    #allocation6 [shape = 's32[1]{0}', space=sflag, size = 0x4, scoped, tag = 'scoped memory for tpu_custom_call.1']
    #allocation7 [shape = 'u8[512]{0}', space=vmem, size = 0x400, scoped, tag = 'input window, operand 2, single buffered']
    #allocation8 [shape = 'u8[32768]{0}', space=vmem, size = 0x8000, scoped, tag = 'input window, operand 3, single buffered']
    #allocation9 [shape = 's32[1]{0}', space=sflag, size = 0x4, scoped, tag = 'scoped memory for tpu_custom_call.1']
    #allocation10 [shape = 'u8[512]{0}', space=vmem, size = 0x400, scoped, tag = 'input window, operand 4, single buffered']
    #allocation11 [shape = 'u8[4096]{0}', space=vmem, size = 0x1000, scoped, tag = 'output window, operand 0, single buffered']
    %10 = vsyncpa [#allocation3], 0
    %11 = vsyncpa [#allocation6], 0
    %12 = vsyncpa [#allocation9], 0
    %13 = vsyncpa [#allocation4], 0
    // Predicated region
    $region2: #{tpu_custom_call.1} parent=1 // pred_check
      _
    $region3: #{tpu_custom_call.1} parent=1 // pred_check_branch
      %15 = sbr.rel (0) target = $region5
    $region4: #{tpu_custom_call.1} parent=1 // pred_region
      %s17 = ssub.s32 64, 64
      %18 = vsyncadd [#allocation3], %s17
      %s20 = sshll.u32 [#allocation2], 4
      %s21 = int_to_ptr.vmem [resolvable:$true] %s20
      %23 = dma.hbm_to_vmem [thread:$0]  %s0, 64, %s21, [#allocation3]
    $region5: #{tpu_custom_call.1} parent=1 // pred_fallthru
      _
    // Predicated region
    $region6: #{tpu_custom_call.1} parent=1 // pred_check
      _
    $region7: #{tpu_custom_call.1} parent=1 // pred_check_branch
      %25 = sbr.rel (0) target = $region9
    $region8: #{tpu_custom_call.1} parent=1 // pred_region
      %s27 = ssub.s32 1024, 1024
      %28 = vsyncadd [#allocation6], %s27
      %s29 = sshll.u32 [#allocation5], 4
      %s30 = int_to_ptr.vmem [resolvable:$true] %s29
      %35 = dma.hbm_to_vmem [thread:$0]  %s1, 1024, %s30, [#allocation6], 64, 64, 4
    $region9: #{tpu_custom_call.1} parent=1 // pred_fallthru
      _
    // Predicated region
    $region10: #{tpu_custom_call.1} parent=1 // pred_check
      _
    $region11: #{tpu_custom_call.1} parent=1 // pred_check_branch
      %37 = sbr.rel (0) target = $region13
    $region12: #{tpu_custom_call.1} parent=1 // pred_region
      %s39 = ssub.s32 16, 16
      %40 = vsyncadd [#allocation6], %s39
      %s42 = sshll.u32 [#allocation7], 4
      %s43 = int_to_ptr.vmem [resolvable:$true] %s42
      %45 = dma.hbm_to_vmem [thread:$0]  %s2, 16, %s43, [#allocation6]
    $region13: #{tpu_custom_call.1} parent=1 // pred_fallthru
      _
    // Predicated region
    $region14: #{tpu_custom_call.1} parent=1 // pred_check
      _
    $region15: #{tpu_custom_call.1} parent=1 // pred_check_branch
      %47 = sbr.rel (0) target = $region17
    $region16: #{tpu_custom_call.1} parent=1 // pred_region
      %s49 = ssub.s32 1024, 1024
      %50 = vsyncadd [#allocation9], %s49
      %s51 = sshll.u32 [#allocation8], 4
      %s52 = int_to_ptr.vmem [resolvable:$true] %s51
      %57 = dma.hbm_to_vmem [thread:$0]  %s3, 1024, %s52, [#allocation9], 64, 64, 4
    $region17: #{tpu_custom_call.1} parent=1 // pred_fallthru
      _
    // Predicated region
    $region18: #{tpu_custom_call.1} parent=1 // pred_check
      _
    $region19: #{tpu_custom_call.1} parent=1 // pred_check_branch
      %59 = sbr.rel (0) target = $region21
    $region20: #{tpu_custom_call.1} parent=1 // pred_region
      %s61 = ssub.s32 16, 16
      %62 = vsyncadd [#allocation9], %s61
      %s64 = sshll.u32 [#allocation10], 4
      %s65 = int_to_ptr.vmem [resolvable:$true] %s64
      %67 = dma.hbm_to_vmem [thread:$0]  %s4, 16, %s65, [#allocation9]
    $region21: #{tpu_custom_call.1} parent=1 // pred_fallthru
      _
    // Predicated region
    $region22: #{tpu_custom_call.1} parent=1 // pred_check
      _
    $region23: #{tpu_custom_call.1} parent=1 // pred_check_branch
      %69 = sbr.rel (0) target = $region25
    $region24: #{tpu_custom_call.1} parent=1 // pred_region
      %70 = dma.done [#allocation3], 64
    $region25: #{tpu_custom_call.1} parent=1 // pred_fallthru
      _
    // Predicated region
    $region26: #{tpu_custom_call.1} parent=1 // pred_check
      _
    $region27: #{tpu_custom_call.1} parent=1 // pred_check_branch
      %72 = sbr.rel (0) target = $region29
    $region28: #{tpu_custom_call.1} parent=1 // pred_region
      %73 = dma.done [#allocation6], 1024
    $region29: #{tpu_custom_call.1} parent=1 // pred_fallthru
      _
    // Predicated region
    $region30: #{tpu_custom_call.1} parent=1 // pred_check
      _
    $region31: #{tpu_custom_call.1} parent=1 // pred_check_branch
      %75 = sbr.rel (0) target = $region33
    $region32: #{tpu_custom_call.1} parent=1 // pred_region
      %76 = dma.done [#allocation6], 16
    $region33: #{tpu_custom_call.1} parent=1 // pred_fallthru
      _
    // Predicated region
    $region34: #{tpu_custom_call.1} parent=1 // pred_check
      _
    $region35: #{tpu_custom_call.1} parent=1 // pred_check_branch
      %78 = sbr.rel (0) target = $region37
    $region36: #{tpu_custom_call.1} parent=1 // pred_region
      %79 = dma.done [#allocation9], 1024
    $region37: #{tpu_custom_call.1} parent=1 // pred_fallthru
      _
    // Predicated region
    $region38: #{tpu_custom_call.1} parent=1 // pred_check
      _
    $region39: #{tpu_custom_call.1} parent=1 // pred_check_branch
      %81 = sbr.rel (0) target = $region41
    $region40: #{tpu_custom_call.1} parent=1 // pred_region
      %82 = dma.done [#allocation9], 16
    $region41: #{tpu_custom_call.1} parent=1 // pred_fallthru
      _
    %v84 = vld [vmem:[#allocation2] sm:$0xf]
    %v85 = vld [vmem:[#allocation5] sm:$0xf]
    %v86 = vld [vmem:[#allocation5 + $0x4] sm:$0xf]
    %v87 = vld [vmem:[#allocation5 + $0x8] sm:$0xf]
    %v88 = vld [vmem:[#allocation5 + $0xc] sm:$0xf]
    %v89 = vld [vmem:[#allocation5 + $0x10] sm:$0xf]
    %v90 = vld [vmem:[#allocation5 + $0x14] sm:$0xf]
    %v91 = vld [vmem:[#allocation5 + $0x18] sm:$0xf]
    %v92 = vld [vmem:[#allocation5 + $0x1c] sm:$0xf]
    %v93 = vld [vmem:[#allocation5 + $0x20] sm:$0xf]
    %v94 = vld [vmem:[#allocation5 + $0x24] sm:$0xf]
    %v95 = vld [vmem:[#allocation5 + $0x28] sm:$0xf]
    %v96 = vld [vmem:[#allocation5 + $0x2c] sm:$0xf]
    %v97 = vld [vmem:[#allocation5 + $0x30] sm:$0xf]
    %v98 = vld [vmem:[#allocation5 + $0x34] sm:$0xf]
    %v99 = vld [vmem:[#allocation5 + $0x38] sm:$0xf]
    %v100 = vld [vmem:[#allocation5 + $0x3c] sm:$0xf]
    %v101 = vld [vmem:[#allocation7] sm:$0x1]
    %v103 = vlaneseq
    %v104 = vshrl.u32 %v103, 7
    %v105 = vsub.s32 0, %v104
    %v106 = vrot.slane %v101, %v105
    %v124 = vunpack.c.l.b16 %v85
    %v125 = vunpack.c.l.b16 %v86
    %v126 = vunpack.c.l.b16 %v87
    %v127 = vunpack.c.l.b16 %v88
    %v128 = vunpack.c.l.b16 %v89
    %v129 = vunpack.c.l.b16 %v90
    %v130 = vunpack.c.l.b16 %v91
    %v131 = vunpack.c.l.b16 %v92
    %v132 = vunpack.c.l.b16 %v93
    %v133 = vunpack.c.l.b16 %v94
    %v134 = vunpack.c.l.b16 %v95
    %v135 = vunpack.c.l.b16 %v96
    %v136 = vunpack.c.l.b16 %v97
    %v137 = vunpack.c.l.b16 %v98
    %v138 = vunpack.c.l.b16 %v99
    %v139 = vunpack.c.l.b16 %v100
    %v140 = vpack.c.b16 %v125, %v124
    %v141 = vpack.c.b16 %v127, %v126
    %v142 = vpack.c.b16 %v129, %v128
    %v143 = vpack.c.b16 %v131, %v130
    %v144 = vpack.c.b16 %v133, %v132
    %v145 = vpack.c.b16 %v135, %v134
    %v146 = vpack.c.b16 %v137, %v136
    %v147 = vpack.c.b16 %v139, %v138
    %156 = vmatprep.subr.bf16.mxu0 0
    %157 = vmatpush1.bf16.msra.mxu0 %v140
    %158 = vmatprep.subr.bf16.mxu0 0
    %159 = vmatpush1.bf16.msra.mxu0 %v141
    %160 = vmatprep.subr.bf16.mxu0 0
    %161 = vmatpush1.bf16.msra.mxu0 %v142
    %162 = vmatprep.subr.bf16.mxu0 0
    %163 = vmatpush1.bf16.msra.mxu0 %v143
    %164 = vmatprep.subr.bf16.mxu0 0
    %165 = vmatpush1.bf16.msra.mxu0 %v144
    %166 = vmatprep.subr.bf16.mxu0 0
    %167 = vmatpush1.bf16.msra.mxu0 %v145
    %168 = vmatprep.subr.bf16.mxu0 0
    %169 = vmatpush1.bf16.msra.mxu0 %v146
    %170 = vmatprep.subr.bf16.mxu0 0
    %171 = vmatpush1.bf16.msra.mxu0 %v147
    %172 = vmatprep.subr.bf16.mxu0 0
    %173 = vmatpush1.bf16.msra.mxu0 0
    %174 = vmatprep.subr.bf16.mxu0 0
    %175 = vmatpush1.bf16.msra.mxu0 0
    %176 = vmatprep.subr.bf16.mxu0 0
    %177 = vmatpush1.bf16.msra.mxu0 0
    %178 = vmatprep.subr.bf16.mxu0 0
    %179 = vmatpush1.bf16.msra.mxu0 0
    %180 = vmatprep.subr.bf16.mxu0 0
    %181 = vmatpush1.bf16.msra.mxu0 0
    %182 = vmatprep.subr.bf16.mxu0 0
    %183 = vmatpush1.bf16.msra.mxu0 0
    %184 = vmatprep.subr.bf16.mxu0 0
    %185 = vmatpush1.bf16.msra.mxu0 0
    %186 = vmatprep.subr.bf16.mxu0 0
    %187 = vmatpush1.bf16.msra.mxu0 0
    %188 = vmatprep.mubr.bf16.mxu0 0
    %189 = vmatmul.mubr.bf16.gmra.mrb[0].mxu0 %v84
    %v190 = vpop.f32.mrb[0].mxu0
    %v191 = vadd.f32 %v106, %v190
    %v192 = vpop.f32.mrb[0].mxu0
    %v193 = vpop.f32.mrb[0].mxu0
    %v194 = vpop.f32.mrb[0].mxu0
    %195 = vdwg.mxu0
    %v196 = vmax.f32 %v191, 0.0
    %v197 = vpack.c.bf16 %v196, %v196
    %v198 = vld [vmem:[#allocation8] sm:$0xf]
    %v199 = vld [vmem:[#allocation8 + $0x4] sm:$0xf]
    %v200 = vld [vmem:[#allocation8 + $0x8] sm:$0xf]
    %v201 = vld [vmem:[#allocation8 + $0xc] sm:$0xf]
    %v202 = vld [vmem:[#allocation8 + $0x10] sm:$0xf]
    %v203 = vld [vmem:[#allocation8 + $0x14] sm:$0xf]
    %v204 = vld [vmem:[#allocation8 + $0x18] sm:$0xf]
    %v205 = vld [vmem:[#allocation8 + $0x1c] sm:$0xf]
    %v206 = vld [vmem:[#allocation8 + $0x20] sm:$0xf]
    %v207 = vld [vmem:[#allocation8 + $0x24] sm:$0xf]
    %v208 = vld [vmem:[#allocation8 + $0x28] sm:$0xf]
    %v209 = vld [vmem:[#allocation8 + $0x2c] sm:$0xf]
    %v210 = vld [vmem:[#allocation8 + $0x30] sm:$0xf]
    %v211 = vld [vmem:[#allocation8 + $0x34] sm:$0xf]
    %v212 = vld [vmem:[#allocation8 + $0x38] sm:$0xf]
    %v213 = vld [vmem:[#allocation8 + $0x3c] sm:$0xf]
    %v214 = vld [vmem:[#allocation10] sm:$0x1]
    %v216 = vlaneseq
    %v217 = vshrl.u32 %v216, 7
    %v218 = vsub.s32 0, %v217
    %v219 = vrot.slane %v214, %v218
    %v237 = vunpack.c.l.b16 %v198
    %v238 = vunpack.c.l.b16 %v199
    %v239 = vunpack.c.l.b16 %v200
    %v240 = vunpack.c.l.b16 %v201
    %v241 = vunpack.c.l.b16 %v202
    %v242 = vunpack.c.l.b16 %v203
    %v243 = vunpack.c.l.b16 %v204
    %v244 = vunpack.c.l.b16 %v205
    %v245 = vunpack.c.l.b16 %v206
    %v246 = vunpack.c.l.b16 %v207
    %v247 = vunpack.c.l.b16 %v208
    %v248 = vunpack.c.l.b16 %v209
    %v249 = vunpack.c.l.b16 %v210
    %v250 = vunpack.c.l.b16 %v211
    %v251 = vunpack.c.l.b16 %v212
    %v252 = vunpack.c.l.b16 %v213
    %v253 = vpack.c.b16 %v238, %v237
    %v254 = vpack.c.b16 %v240, %v239
    %v255 = vpack.c.b16 %v242, %v241
    %v256 = vpack.c.b16 %v244, %v243
    %v257 = vpack.c.b16 %v246, %v245
    %v258 = vpack.c.b16 %v248, %v247
    %v259 = vpack.c.b16 %v250, %v249
    %v260 = vpack.c.b16 %v252, %v251
    %269 = vmatprep.subr.bf16.mxu0 0
    %270 = vmatpush1.bf16.msra.mxu0 %v253
    %271 = vmatprep.subr.bf16.mxu0 0
    %272 = vmatpush1.bf16.msra.mxu0 %v254
    %273 = vmatprep.subr.bf16.mxu0 0
    %274 = vmatpush1.bf16.msra.mxu0 %v255
    %275 = vmatprep.subr.bf16.mxu0 0
    %276 = vmatpush1.bf16.msra.mxu0 %v256
    %277 = vmatprep.subr.bf16.mxu0 0
    %278 = vmatpush1.bf16.msra.mxu0 %v257
    %279 = vmatprep.subr.bf16.mxu0 0
    %280 = vmatpush1.bf16.msra.mxu0 %v258
    %281 = vmatprep.subr.bf16.mxu0 0
    %282 = vmatpush1.bf16.msra.mxu0 %v259
    %283 = vmatprep.subr.bf16.mxu0 0
    %284 = vmatpush1.bf16.msra.mxu0 %v260
    %285 = vmatprep.subr.bf16.mxu0 0
    %286 = vmatpush1.bf16.msra.mxu0 0
    %287 = vmatprep.subr.bf16.mxu0 0
    %288 = vmatpush1.bf16.msra.mxu0 0
    %289 = vmatprep.subr.bf16.mxu0 0
    %290 = vmatpush1.bf16.msra.mxu0 0
    %291 = vmatprep.subr.bf16.mxu0 0
    %292 = vmatpush1.bf16.msra.mxu0 0
    %293 = vmatprep.subr.bf16.mxu0 0
    %294 = vmatpush1.bf16.msra.mxu0 0
    %295 = vmatprep.subr.bf16.mxu0 0
    %296 = vmatpush1.bf16.msra.mxu0 0
    %297 = vmatprep.subr.bf16.mxu0 0
    %298 = vmatpush1.bf16.msra.mxu0 0
    %299 = vmatprep.subr.bf16.mxu0 0
    %300 = vmatpush1.bf16.msra.mxu0 0
    %301 = vmatprep.mubr.bf16.mxu0 0
    %302 = vmatmul.mubr.bf16.gmra.mrb[0].mxu0 %v197
    %v303 = vpop.f32.mrb[0].mxu0
    %v304 = vadd.f32 %v219, %v303
    %v305 = vpop.f32.mrb[0].mxu0
    %v306 = vpop.f32.mrb[0].mxu0
    %v307 = vpop.f32.mrb[0].mxu0
    %308 = vdwg.mxu0
    %v309 = vxor.u32 %v304, 2147483648
    %v310 = vmul.f32 %v309, 1.442695
    %v311 = vpow.pop %v310
    %v312 = vadd.f32 %v311, 1.0
    %v313 = vrcp.pop %v312
    %v314 = vmul.f32 1.0, %v313
    %315 = vst [vmem:[#allocation11] sm:$0xff] %v314
    // Predicated region
    $region42: #{tpu_custom_call.1} parent=1 // pred_check
      _
    $region43: #{tpu_custom_call.1} parent=1 // pred_check_branch
      %317 = sbr.rel (0) target = $region45
    $region44: #{tpu_custom_call.1} parent=1 // pred_region
      %s319 = ssub.s32 128, 128
      %320 = vsyncadd [#allocation4], %s319
      %s322 = sshll.u32 [#allocation11], 4
      %s323 = int_to_ptr.vmem [resolvable:$true] %s322
      %325 = dma.vmem_to_hbm [thread:$0]  %s323, 128, %s5, [#allocation4]
    $region45: #{tpu_custom_call.1} parent=1 // pred_fallthru
      _
    // Predicated region
    $region46: #{tpu_custom_call.1} parent=1 // pred_check
      _
    $region47: #{tpu_custom_call.1} parent=1 // pred_check_branch
      %327 = sbr.rel (0) target = $region49
    $region48: #{tpu_custom_call.1} parent=1 // pred_region
      %328 = dma.done [#allocation4], 128
    $region49: #{tpu_custom_call.1} parent=1 // pred_fallthru
      _
    %329 = vsyncpa [#allocation3], 1
    %330 = vsyncpa [#allocation6], 1
    %331 = vsyncpa [#allocation9], 1
    %332 = vsyncpa [#allocation4], 1

</llo_original>
